<compile_context>
chip_gen: v7x
topology: tpu7x:2x2x1
jax: 0.10.0
libtpu: 0.0.40
codegen_flags: <defaults>
</compile_context>

<pallas_src>
import jax
import jax.numpy as jnp
from jax import lax
from jax.experimental import pallas as pl
from jax.experimental.pallas import tpu as pltpu


def _round_up(n, m):
    return ((n + m - 1) // m) * m


def _pick_chunk(T, max_chunk=64):
    """Largest divisor of T that is <= max_chunk (keeps the T-grid exact)."""
    for c in range(min(T, max_chunk), 0, -1):
        if T % c == 0:
            return c
    return T


def _vmem_bytes(shape, itemsize):
    dims = list(shape)
    dims[-1] = _round_up(dims[-1], 128)
    if len(dims) >= 2:
        dims[-2] = _round_up(dims[-2], 8)
    n = itemsize
    for d in dims:
        n *= d
    return n


def _make_kernel(n_layers, chunk, batch_p, hidden, gate_w, xproj_w):
    L, Tc, Bp, H, G4, Wx = n_layers, chunk, batch_p, hidden, gate_w, xproj_w
    BF = jnp.bfloat16

    def kernel(x_ref, wx0_ref, wxr_ref, wmhh_ref, whh_ref, b_ref,
               out_ref, h_ref, c_ref, xg0_ref):
        # x_ref:    (1, Tc*Bp, P)  bf16  current time-chunk, flattened (t, batch) rows
        # wx0_ref:  (P, Wx)        bf16  layer-0 fused [W_ih^T | W_mih^T]
        # wxr_ref:  (L, H, Wx)     bf16  layers>0 fused x-side weights ([0] unused)
        # wmhh_ref: (L, H, H)      bf16  W_mhh^T
        # whh_ref:  (L, H, G4)     bf16  W_hh^T (packed gate block)
        # b_ref:    (L, 1, G4)     f32   folded bias b_ih + b_hh
        # out_ref:  (Tc, Bp, H)    f32   outputs for this chunk
        # h_ref/c_ref: (L, Bp, H)  f32   resident state (constant-index output blocks)
        # xg0_ref:  (Tc*Bp, Wx)    f32   hoisted layer-0 projection scratch

        # First chunk: zero initial hidden/cell state (rnn.state0).
        @pl.when(pl.program_id(0) == 0)
        def _():
            h_ref[...] = jnp.zeros_like(h_ref)
            c_ref[...] = jnp.zeros_like(c_ref)

        # Layer-0 input projection for the whole chunk, hoisted out of the recurrence.
        xg0_ref[...] = jnp.dot(x_ref[0], wx0_ref[...],
                               preferred_element_type=jnp.float32)

        # Loop-invariant hoists (JAX does not CSE broadcast_in_dim).
        biases = [jnp.broadcast_to(b_ref[l], (Bp, G4)) for l in range(L)]

        def step(t, carry):
            hs = list(carry[0])
            cs = list(carry[1])
            r0 = pl.multiple_of(t * Bp, Bp)
            inp = None
            for l in range(L):                                    # static unroll
                if l == 0:
                    xg = xg0_ref[pl.ds(r0, Bp), :]                # (Bp, Wx) f32
                else:
                    xg = jnp.dot(inp.astype(BF), wxr_ref[l],
                                 preferred_element_type=jnp.float32)
                hm = jnp.dot(hs[l].astype(BF), wmhh_ref[l],
                             preferred_element_type=jnp.float32)  # (Bp, H)
                m = xg[:, G4:G4 + H] * hm                         # (Bp, H)
                gates = (xg[:, :G4]
                         + jnp.dot(m.astype(BF), whh_ref[l],
                                   preferred_element_type=jnp.float32)
                         + biases[l])                             # (Bp, G4) f32
                i_g = jax.nn.sigmoid(gates[:, 0 * H:1 * H])
                f_g = jax.nn.sigmoid(gates[:, 1 * H:2 * H])
                g_g = jnp.tanh(gates[:, 2 * H:3 * H])
                o_g = jax.nn.sigmoid(gates[:, 3 * H:4 * H])
                cy = f_g * cs[l] + i_g * g_g
                hy = o_g * jnp.tanh(cy)
                hs[l] = hy
                cs[l] = cy
                inp = hy                              # dropout identity (eval mode)
            out_ref[t] = inp
            return (tuple(hs), tuple(cs))

        init = (tuple(h_ref[l] for l in range(L)),
                tuple(c_ref[l] for l in range(L)))
        hs, cs = lax.fori_loop(0, Tc, step, init)
        for l in range(L):
            h_ref[l] = hs[l]
            c_ref[l] = cs[l]

    return kernel


def recurrent_sequential_forward(x, params, n_layers, rnn_size):
    """x: [T, B, in_size] float32. params: list of per-layer dicts (torch layout).

    Returns (outputs [T,B,H], (h [L,B,H], c [L,B,H])) like the PyTorch module."""
    T, B, D = x.shape
    H = rnn_size
    L = n_layers
    P = _round_up(D, 128)           # lane pad for the input feature dim
    Bp = _round_up(max(B, 8), 8)    # sublane pad for the batch
    G4 = _round_up(4 * H, 128)      # packed 4-gate block, lane aligned
    Wx = G4 + H                     # fused x-side projection width: [gates | mih]
    Tc = _pick_chunk(T)
    n_chunks = T // Tc

    # Pad + flatten the input sequence to (n_chunks, Tc*Bp, P), bf16 MXU operand.
    x_pad = jnp.zeros((T, Bp, P), jnp.float32).at[:, :B, :D].set(x)
    x_pad = x_pad.reshape(n_chunks, Tc * Bp, P).astype(jnp.bfloat16)

    # Pack weights (bf16 for the MXU; exact contraction dims, packed gate block).
    wx0 = jnp.zeros((P, Wx), jnp.float32)
    wxr = jnp.zeros((L, H, Wx), jnp.float32)     # [0] unused (layer 0 uses wx0)
    wmhh = jnp.zeros((L, H, H), jnp.float32)
    whh = jnp.zeros((L, H, G4), jnp.float32)
    bias = jnp.zeros((L, 1, G4), jnp.float32)

    for l in range(L):
        p = params[l]
        if l == 0:
            wx0 = wx0.at[:D, :4 * H].set(p["w_ih"].T)
            wx0 = wx0.at[:D, G4:G4 + H].set(p["w_mih"].T)
        else:
            wxr = wxr.at[l, :, :4 * H].set(p["w_ih"].T)
            wxr = wxr.at[l, :, G4:G4 + H].set(p["w_mih"].T)
        wmhh = wmhh.at[l].set(p["w_mhh"].T)
        whh = whh.at[l, :, :4 * H].set(p["w_hh"].T)
        bias = bias.at[l, 0, :4 * H].set(p["b_ih"] + p["b_hh"])   # exact fold
    wx0 = wx0.astype(jnp.bfloat16)
    wxr = wxr.astype(jnp.bfloat16)
    wmhh = wmhh.astype(jnp.bfloat16)
    whh = whh.astype(jnp.bfloat16)

    out_shapes = (
        jax.ShapeDtypeStruct((T, Bp, H), jnp.float32),   # stacked outputs
        jax.ShapeDtypeStruct((L, Bp, H), jnp.float32),   # h_1
        jax.ShapeDtypeStruct((L, Bp, H), jnp.float32),   # c_1
    )

    # VMEM budget: chunk double-buffers + resident weights/bias/state + scratch, 2x margin.
    est = (2 * _vmem_bytes((1, Tc * Bp, P), 2)
           + 2 * _vmem_bytes((Tc, Bp, H), 4)
           + _vmem_bytes((P, Wx), 2) + _vmem_bytes((L, H, Wx), 2)
           + _vmem_bytes((L, H, H), 2) + _vmem_bytes((L, H, G4), 2)
           + _vmem_bytes((L, 1, G4), 4)
           + 2 * _vmem_bytes((L, Bp, H), 4)
           + _vmem_bytes((Tc * Bp, Wx), 4))
    vmem_limit = int(min(max(2 * est, 16 * 2 ** 20), 64 * 2 ** 20))

    grid_spec = pltpu.PrefetchScalarGridSpec(
        num_scalar_prefetch=0,
        grid=(n_chunks,),
        in_specs=[
            pl.BlockSpec((1, Tc * Bp, P), lambda t: (t, 0, 0)),   # x chunk (streamed)
            pl.BlockSpec((P, Wx), lambda t: (0, 0)),              # weights: resident
            pl.BlockSpec((L, H, Wx), lambda t: (0, 0, 0)),
            pl.BlockSpec((L, H, H), lambda t: (0, 0, 0)),
            pl.BlockSpec((L, H, G4), lambda t: (0, 0, 0)),
            pl.BlockSpec((L, 1, G4), lambda t: (0, 0, 0)),
        ],
        out_specs=(
            pl.BlockSpec((Tc, Bp, H), lambda t: (t, 0, 0)),       # out chunk (streamed)
            pl.BlockSpec((L, Bp, H), lambda t: (0, 0, 0)),        # h state (resident)
            pl.BlockSpec((L, Bp, H), lambda t: (0, 0, 0)),        # c state (resident)
        ),
        scratch_shapes=[pltpu.VMEM((Tc * Bp, Wx), jnp.float32)],
    )

    outputs, h1, c1 = pl.pallas_call(
        _make_kernel(L, Tc, Bp, H, G4, Wx),
        out_shape=out_shapes,
        grid_spec=grid_spec,
        compiler_params=pltpu.CompilerParams(
            dimension_semantics=("arbitrary",),
            vmem_limit_bytes=vmem_limit),
    )(x_pad, wx0, wxr, wmhh, whh, bias)

    # Padded batch rows (B..Bp) accumulate bias-driven state; sliced off here.
    return outputs[:, :B, :], (h1[:, :B, :], c1[:, :B, :])


def _init_params(key, n_layers, in_size, rnn_size):
    """Deterministic mLSTMCell parameter init: uniform(-1/sqrt(H), 1/sqrt(H))."""
    H = rnn_size
    stdv = 1.0 / jnp.sqrt(jnp.float32(H))
    params = []
    d = in_size
    for _ in range(n_layers):
        key, *ks = jax.random.split(key, 7)
        u = lambda k, shape: jax.random.uniform(k, shape, jnp.float32, -stdv, stdv)
        params.append({
            "w_ih": u(ks[0], (4 * H, d)),
            "w_hh": u(ks[1], (4 * H, H)),
            "w_mih": u(ks[2], (H, d)),
            "w_mhh": u(ks[3], (H, H)),
            "b_ih": u(ks[4], (4 * H,)),
            "b_hh": u(ks[5], (4 * H,)),
        })
        d = H
    return params


def _reference(x, params, n_layers, H):
    """Pure-JAX f32 reference mirroring the PyTorch StackedLSTM/mLSTMCell loop."""
    T, B, _ = x.shape
    h = jnp.zeros((n_layers, B, H), jnp.float32)
    c = jnp.zeros((n_layers, B, H), jnp.float32)
    outs = []
    for t in range(T):
        inp = x[t]
        hs, cs = [], []
        for l in range(n_layers):
            p = params[l]
            m = (inp @ p["w_mih"].T) * (h[l] @ p["w_mhh"].T)
            gates = inp @ p["w_ih"].T + p["b_ih"] + m @ p["w_hh"].T + p["b_hh"]
            i_g, f_g, g_g, o_g = jnp.split(gates, 4, axis=1)
            cy = jax.nn.sigmoid(f_g) * c[l] + jax.nn.sigmoid(i_g) * jnp.tanh(g_g)
            hy = jax.nn.sigmoid(o_g) * jnp.tanh(cy)
            hs.append(hy)
            cs.append(cy)
            inp = hy
        h = jnp.stack(hs)
        c = jnp.stack(cs)
        outs.append(inp)
    return jnp.stack(outs), h, c


if __name__ == "__main__":
    # Small shapes implied by the module's forward:
    T, B, IN_SIZE, RNN_SIZE, N_LAYERS = 8, 2, 32, 32, 2

    key = jax.random.PRNGKey(0)
    kx, kp = jax.random.split(key)
    x = jax.random.normal(kx, (T, B, IN_SIZE), jnp.float32)
    params = _init_params(kp, N_LAYERS, IN_SIZE, RNN_SIZE)

    outputs, (h1, c1) = recurrent_sequential_forward(x, params, N_LAYERS, RNN_SIZE)
    jax.block_until_ready((outputs, h1, c1))

    ref_out, ref_h, ref_c = _reference(x, params, N_LAYERS, RNN_SIZE)
    assert outputs.shape == (T, B, RNN_SIZE)
    assert h1.shape == (N_LAYERS, B, RNN_SIZE) and c1.shape == (N_LAYERS, B, RNN_SIZE)
    # bf16 MXU operands (f32 accumulate/state) vs f32 reference -> loosened tolerance.
    assert jnp.allclose(outputs, ref_out, atol=5e-2, rtol=5e-2)
    assert jnp.allclose(h1, ref_h, atol=5e-2, rtol=5e-2)
    assert jnp.allclose(c1, ref_c, atol=5e-2, rtol=5e-2)

    print("KERNEL_OK")
</pallas_src>

<mosaic_0001>
module attributes {stable_mosaic.version = 11 : i64} {
  func.func @kernel(%arg0: i32, %arg1: memref<1x64x128xbf16, #tpu.memory_space<vmem>>, %arg2: memref<128x160xbf16, #tpu.memory_space<vmem>>, %arg3: memref<2x32x160xbf16, #tpu.memory_space<vmem>>, %arg4: memref<2x32x32xbf16, #tpu.memory_space<vmem>>, %arg5: memref<2x32x128xbf16, #tpu.memory_space<vmem>>, %arg6: memref<2x1x128xf32, #tpu.memory_space<vmem>>, %arg7: memref<8x8x32xf32, #tpu.memory_space<vmem>>, %arg8: memref<2x8x32xf32, #tpu.memory_space<vmem>>, %arg9: memref<2x8x32xf32, #tpu.memory_space<vmem>>, %arg10: memref<64x160xf32, #tpu.memory_space<vmem>>) attributes {dimension_semantics = [#tpu.dimension_semantics<arbitrary>], iteration_bounds = array<i64: 1>, scalar_prefetch = 0 : i64, scratch_operands = 1 : i64, tpu.core_type = #tpu.core_type<tc>, window_params = [{transform_indices = @transform_0, window_bounds = array<i64: 1, 64, 128>}, {pipeline_mode = #tpu.pipeline_mode<synchronous>, transform_indices = @transform_1, window_bounds = array<i64: 128, 160>}, {pipeline_mode = #tpu.pipeline_mode<synchronous>, transform_indices = @transform_2, window_bounds = array<i64: 2, 32, 160>}, {pipeline_mode = #tpu.pipeline_mode<synchronous>, transform_indices = @transform_3, window_bounds = array<i64: 2, 32, 32>}, {pipeline_mode = #tpu.pipeline_mode<synchronous>, transform_indices = @transform_4, window_bounds = array<i64: 2, 32, 128>}, {pipeline_mode = #tpu.pipeline_mode<synchronous>, transform_indices = @transform_5, window_bounds = array<i64: 2, 1, 128>}, {transform_indices = @transform_6, window_bounds = array<i64: 8, 8, 32>}, {pipeline_mode = #tpu.pipeline_mode<synchronous>, transform_indices = @transform_7, window_bounds = array<i64: 2, 8, 32>}, {pipeline_mode = #tpu.pipeline_mode<synchronous>, transform_indices = @transform_8, window_bounds = array<i64: 2, 8, 32>}]} {
    %c0_i32 = arith.constant 0 : i32
    %0 = arith.cmpi eq, %arg0, %c0_i32 : i32
    %1 = arith.extui %0 : i1 to i32
    %c0_i32_0 = arith.constant 0 : i32
    %2 = arith.cmpi ne, %1, %c0_i32_0 : i32
    scf.if %2 {
      %cst_38 = arith.constant 0.000000e+00 : f32
      %38 = vector.broadcast %cst_38 : f32 to vector<2x8x32xf32>
      %c0_39 = arith.constant 0 : index
      %c0_40 = arith.constant 0 : index
      %c0_41 = arith.constant 0 : index
      %39 = vector.load %arg8[%c0_39, %c0_40, %c0_41] : memref<2x8x32xf32, #tpu.memory_space<vmem>>, vector<2x8x32xf32>
      tpu.vector_store %arg8[%c0_39, %c0_40, %c0_41], %38 {strides = array<i32>} : memref<2x8x32xf32, #tpu.memory_space<vmem>>, vector<2x8x32xf32>,
      %cst_42 = arith.constant 0.000000e+00 : f32
      %40 = vector.broadcast %cst_42 : f32 to vector<2x8x32xf32>
      %c0_43 = arith.constant 0 : index
      %c0_44 = arith.constant 0 : index
      %c0_45 = arith.constant 0 : index
      %41 = vector.load %arg9[%c0_43, %c0_44, %c0_45] : memref<2x8x32xf32, #tpu.memory_space<vmem>>, vector<2x8x32xf32>
      tpu.vector_store %arg9[%c0_43, %c0_44, %c0_45], %40 {strides = array<i32>} : memref<2x8x32xf32, #tpu.memory_space<vmem>>, vector<2x8x32xf32>,
    } else {
    }
    %c0 = arith.constant 0 : index
    %c0_1 = arith.constant 0 : index
    %c0_2 = arith.constant 0 : index
    %3 = vector.load %arg1[%c0, %c0_1, %c0_2] : memref<1x64x128xbf16, #tpu.memory_space<vmem>>, vector<1x64x128xbf16>
    %4 = vector.shape_cast %3 : vector<1x64x128xbf16> to vector<64x128xbf16>
    %c0_3 = arith.constant 0 : index
    %c0_4 = arith.constant 0 : index
    %5 = vector.load %arg2[%c0_3, %c0_4] : memref<128x160xbf16, #tpu.memory_space<vmem>>, vector<128x160xbf16>
    %cst = arith.constant dense<0.000000e+00> : vector<64x160xf32>
    %6 = tpu.matmul %4, %5, %cst {dimension_numbers = #tpu.dot_dimension_numbers<[1], [0], [0], [1], [0, 0, 1, 1], [], []>} : vector<64x128xbf16>, vector<128x160xbf16>, vector<64x160xf32> -> vector<64x160xf32>
    %c0_5 = arith.constant 0 : index
    %c0_6 = arith.constant 0 : index
    %7 = vector.load %arg10[%c0_5, %c0_6] : memref<64x160xf32, #tpu.memory_space<vmem>>, vector<64x160xf32>
    tpu.vector_store %arg10[%c0_5, %c0_6], %6 {strides = array<i32>} : memref<64x160xf32, #tpu.memory_space<vmem>>, vector<64x160xf32>,
    %c0_7 = arith.constant 0 : index
    %c0_8 = arith.constant 0 : index
    %c0_9 = arith.constant 0 : index
    %8 = vector.load %arg6[%c0_7, %c0_8, %c0_9] : memref<2x1x128xf32, #tpu.memory_space<vmem>>, vector<1x1x128xf32>
    %9 = vector.shape_cast %8 : vector<1x1x128xf32> to vector<1x128xf32>
    %10 = vector.shape_cast %9 : vector<1x128xf32> to vector<1x128xf32>
    %11 = vector.broadcast %10 : vector<1x128xf32> to vector<8x128xf32>
    %c1 = arith.constant 1 : index
    %c0_10 = arith.constant 0 : index
    %c0_11 = arith.constant 0 : index
    %12 = vector.load %arg6[%c1, %c0_10, %c0_11] : memref<2x1x128xf32, #tpu.memory_space<vmem>>, vector<1x1x128xf32>
    %13 = vector.shape_cast %12 : vector<1x1x128xf32> to vector<1x128xf32>
    %14 = vector.shape_cast %13 : vector<1x128xf32> to vector<1x128xf32>
    %15 = vector.broadcast %14 : vector<1x128xf32> to vector<8x128xf32>
    %c0_12 = arith.constant 0 : index
    %c0_13 = arith.constant 0 : index
    %c0_14 = arith.constant 0 : index
    %16 = vector.load %arg8[%c0_12, %c0_13, %c0_14] : memref<2x8x32xf32, #tpu.memory_space<vmem>>, vector<1x8x32xf32>
    %17 = vector.shape_cast %16 : vector<1x8x32xf32> to vector<8x32xf32>
    %c1_15 = arith.constant 1 : index
    %c0_16 = arith.constant 0 : index
    %c0_17 = arith.constant 0 : index
    %18 = vector.load %arg8[%c1_15, %c0_16, %c0_17] : memref<2x8x32xf32, #tpu.memory_space<vmem>>, vector<1x8x32xf32>
    %19 = vector.shape_cast %18 : vector<1x8x32xf32> to vector<8x32xf32>
    %c0_18 = arith.constant 0 : index
    %c0_19 = arith.constant 0 : index
    %c0_20 = arith.constant 0 : index
    %20 = vector.load %arg9[%c0_18, %c0_19, %c0_20] : memref<2x8x32xf32, #tpu.memory_space<vmem>>, vector<1x8x32xf32>
    %21 = vector.shape_cast %20 : vector<1x8x32xf32> to vector<8x32xf32>
    %c1_21 = arith.constant 1 : index
    %c0_22 = arith.constant 0 : index
    %c0_23 = arith.constant 0 : index
    %22 = vector.load %arg9[%c1_21, %c0_22, %c0_23] : memref<2x8x32xf32, #tpu.memory_space<vmem>>, vector<1x8x32xf32>
    %23 = vector.shape_cast %22 : vector<1x8x32xf32> to vector<8x32xf32>
    %c0_i32_24 = arith.constant 0 : i32
    %c8_i32 = arith.constant 8 : i32
    %24 = arith.addi %c0_i32_24, %c8_i32 : i32
    %c1_i32 = arith.constant 1 : i32
    %25:4 = scf.for %arg11 = %c0_i32_24 to %24 step %c1_i32 iter_args(%arg12 = %17, %arg13 = %19, %arg14 = %21, %arg15 = %23) -> (vector<8x32xf32>, vector<8x32xf32>, vector<8x32xf32>, vector<8x32xf32>)  : i32 {
      %c8_i32_38 = arith.constant 8 : i32
      %38 = arith.muli %arg11, %c8_i32_38 : i32
      %39 = tpu.assume_multiple %38, 8 : i32
      %40 = arith.index_cast %39 : i32 to index
      %c0_39 = arith.constant 0 : index
      %41 = vector.load %arg10[%40, %c0_39] : memref<64x160xf32, #tpu.memory_space<vmem>>, vector<8x160xf32>
      %42 = arith.truncf %arg12 : vector<8x32xf32> to vector<8x32xbf16>
      %c0_40 = arith.constant 0 : index
      %c0_41 = arith.constant 0 : index
      %c0_42 = arith.constant 0 : index
      %43 = vector.load %arg4[%c0_40, %c0_41, %c0_42] : memref<2x32x32xbf16, #tpu.memory_space<vmem>>, vector<1x32x32xbf16>
      %44 = vector.shape_cast %43 : vector<1x32x32xbf16> to vector<32x32xbf16>
      %cst_43 = arith.constant dense<0.000000e+00> : vector<8x32xf32>
      %45 = tpu.matmul %42, %44, %cst_43 {dimension_numbers = #tpu.dot_dimension_numbers<[1], [0], [0], [1], [0, 0, 1, 1], [], []>} : vector<8x32xbf16>, vector<32x32xbf16>, vector<8x32xf32> -> vector<8x32xf32>
      %46 = vector.extract_strided_slice %41 {offsets = [0, 128], sizes = [8, 32], strides = [1, 1]} : vector<8x160xf32> to vector<8x32xf32>
      %47 = arith.mulf %46, %45 : vector<8x32xf32>
      %48 = vector.extract_strided_slice %41 {offsets = [0, 0], sizes = [8, 128], strides = [1, 1]} : vector<8x160xf32> to vector<8x128xf32>
      %49 = arith.truncf %47 : vector<8x32xf32> to vector<8x32xbf16>
      %c0_44 = arith.constant 0 : index
      %c0_45 = arith.constant 0 : index
      %c0_46 = arith.constant 0 : index
      %50 = vector.load %arg5[%c0_44, %c0_45, %c0_46] : memref<2x32x128xbf16, #tpu.memory_space<vmem>>, vector<1x32x128xbf16>
      %51 = vector.shape_cast %50 : vector<1x32x128xbf16> to vector<32x128xbf16>
      %cst_47 = arith.constant dense<0.000000e+00> : vector<8x128xf32>
      %52 = tpu.matmul %49, %51, %cst_47 {dimension_numbers = #tpu.dot_dimension_numbers<[1], [0], [0], [1], [0, 0, 1, 1], [], []>} : vector<8x32xbf16>, vector<32x128xbf16>, vector<8x128xf32> -> vector<8x128xf32>
      %53 = arith.addf %48, %52 : vector<8x128xf32>
      %54 = arith.addf %53, %11 : vector<8x128xf32>
      %55 = vector.extract_strided_slice %54 {offsets = [0, 0], sizes = [8, 32], strides = [1, 1]} : vector<8x128xf32> to vector<8x32xf32>
      %56 = arith.negf %55 : vector<8x32xf32>
      %57 = math.exp %56 : vector<8x32xf32>
      %cst_48 = arith.constant 1.000000e+00 : f32
      %58 = vector.broadcast %cst_48 : f32 to vector<8x32xf32>
      %59 = arith.addf %58, %57 : vector<8x32xf32>
      %60 = arith.divf %58, %59 : vector<8x32xf32>
      %61 = vector.extract_strided_slice %54 {offsets = [0, 32], sizes = [8, 32], strides = [1, 1]} : vector<8x128xf32> to vector<8x32xf32>
      %62 = arith.negf %61 : vector<8x32xf32>
      %63 = math.exp %62 : vector<8x32xf32>
      %cst_49 = arith.constant 1.000000e+00 : f32
      %64 = vector.broadcast %cst_49 : f32 to vector<8x32xf32>
      %65 = arith.addf %64, %63 : vector<8x32xf32>
      %66 = arith.divf %64, %65 : vector<8x32xf32>
      %67 = vector.extract_strided_slice %54 {offsets = [0, 64], sizes = [8, 32], strides = [1, 1]} : vector<8x128xf32> to vector<8x32xf32>
      %68 = math.tanh %67 : vector<8x32xf32>
      %69 = vector.extract_strided_slice %54 {offsets = [0, 96], sizes = [8, 32], strides = [1, 1]} : vector<8x128xf32> to vector<8x32xf32>
      %70 = arith.negf %69 : vector<8x32xf32>
      %71 = math.exp %70 : vector<8x32xf32>
      %cst_50 = arith.constant 1.000000e+00 : f32
      %72 = vector.broadcast %cst_50 : f32 to vector<8x32xf32>
      %73 = arith.addf %72, %71 : vector<8x32xf32>
      %74 = arith.divf %72, %73 : vector<8x32xf32>
      %75 = arith.mulf %66, %arg14 : vector<8x32xf32>
      %76 = arith.mulf %60, %68 : vector<8x32xf32>
      %77 = arith.addf %75, %76 : vector<8x32xf32>
      %78 = math.tanh %77 : vector<8x32xf32>
      %79 = arith.mulf %74, %78 : vector<8x32xf32>
      %80 = arith.truncf %79 : vector<8x32xf32> to vector<8x32xbf16>
      %c1_51 = arith.constant 1 : index
      %c0_52 = arith.constant 0 : index
      %c0_53 = arith.constant 0 : index
      %81 = vector.load %arg3[%c1_51, %c0_52, %c0_53] : memref<2x32x160xbf16, #tpu.memory_space<vmem>>, vector<1x32x160xbf16>
      %82 = vector.shape_cast %81 : vector<1x32x160xbf16> to vector<32x160xbf16>
      %cst_54 = arith.constant dense<0.000000e+00> : vector<8x160xf32>
      %83 = tpu.matmul %80, %82, %cst_54 {dimension_numbers = #tpu.dot_dimension_numbers<[1], [0], [0], [1], [0, 0, 1, 1], [], []>} : vector<8x32xbf16>, vector<32x160xbf16>, vector<8x160xf32> -> vector<8x160xf32>
      %84 = arith.truncf %arg13 : vector<8x32xf32> to vector<8x32xbf16>
      %c1_55 = arith.constant 1 : index
      %c0_56 = arith.constant 0 : index
      %c0_57 = arith.constant 0 : index
      %85 = vector.load %arg4[%c1_55, %c0_56, %c0_57] : memref<2x32x32xbf16, #tpu.memory_space<vmem>>, vector<1x32x32xbf16>
      %86 = vector.shape_cast %85 : vector<1x32x32xbf16> to vector<32x32xbf16>
      %cst_58 = arith.constant dense<0.000000e+00> : vector<8x32xf32>
      %87 = tpu.matmul %84, %86, %cst_58 {dimension_numbers = #tpu.dot_dimension_numbers<[1], [0], [0], [1], [0, 0, 1, 1], [], []>} : vector<8x32xbf16>, vector<32x32xbf16>, vector<8x32xf32> -> vector<8x32xf32>
      %88 = vector.extract_strided_slice %83 {offsets = [0, 128], sizes = [8, 32], strides = [1, 1]} : vector<8x160xf32> to vector<8x32xf32>
      %89 = arith.mulf %88, %87 : vector<8x32xf32>
      %90 = vector.extract_strided_slice %83 {offsets = [0, 0], sizes = [8, 128], strides = [1, 1]} : vector<8x160xf32> to vector<8x128xf32>
      %91 = arith.truncf %89 : vector<8x32xf32> to vector<8x32xbf16>
      %c1_59 = arith.constant 1 : index
      %c0_60 = arith.constant 0 : index
      %c0_61 = arith.constant 0 : index
      %92 = vector.load %arg5[%c1_59, %c0_60, %c0_61] : memref<2x32x128xbf16, #tpu.memory_space<vmem>>, vector<1x32x128xbf16>
      %93 = vector.shape_cast %92 : vector<1x32x128xbf16> to vector<32x128xbf16>
      %cst_62 = arith.constant dense<0.000000e+00> : vector<8x128xf32>
      %94 = tpu.matmul %91, %93, %cst_62 {dimension_numbers = #tpu.dot_dimension_numbers<[1], [0], [0], [1], [0, 0, 1, 1], [], []>} : vector<8x32xbf16>, vector<32x128xbf16>, vector<8x128xf32> -> vector<8x128xf32>
      %95 = arith.addf %90, %94 : vector<8x128xf32>
      %96 = arith.addf %95, %15 : vector<8x128xf32>
      %97 = vector.extract_strided_slice %96 {offsets = [0, 0], sizes = [8, 32], strides = [1, 1]} : vector<8x128xf32> to vector<8x32xf32>
      %98 = arith.negf %97 : vector<8x32xf32>
      %99 = math.exp %98 : vector<8x32xf32>
      %cst_63 = arith.constant 1.000000e+00 : f32
      %100 = vector.broadcast %cst_63 : f32 to vector<8x32xf32>
      %101 = arith.addf %100, %99 : vector<8x32xf32>
      %102 = arith.divf %100, %101 : vector<8x32xf32>
      %103 = vector.extract_strided_slice %96 {offsets = [0, 32], sizes = [8, 32], strides = [1, 1]} : vector<8x128xf32> to vector<8x32xf32>
      %104 = arith.negf %103 : vector<8x32xf32>
      %105 = math.exp %104 : vector<8x32xf32>
      %cst_64 = arith.constant 1.000000e+00 : f32
      %106 = vector.broadcast %cst_64 : f32 to vector<8x32xf32>
      %107 = arith.addf %106, %105 : vector<8x32xf32>
      %108 = arith.divf %106, %107 : vector<8x32xf32>
      %109 = vector.extract_strided_slice %96 {offsets = [0, 64], sizes = [8, 32], strides = [1, 1]} : vector<8x128xf32> to vector<8x32xf32>
      %110 = math.tanh %109 : vector<8x32xf32>
      %111 = vector.extract_strided_slice %96 {offsets = [0, 96], sizes = [8, 32], strides = [1, 1]} : vector<8x128xf32> to vector<8x32xf32>
      %112 = arith.negf %111 : vector<8x32xf32>
      %113 = math.exp %112 : vector<8x32xf32>
      %cst_65 = arith.constant 1.000000e+00 : f32
      %114 = vector.broadcast %cst_65 : f32 to vector<8x32xf32>
      %115 = arith.addf %114, %113 : vector<8x32xf32>
      %116 = arith.divf %114, %115 : vector<8x32xf32>
      %117 = arith.mulf %108, %arg15 : vector<8x32xf32>
      %118 = arith.mulf %102, %110 : vector<8x32xf32>
      %119 = arith.addf %117, %118 : vector<8x32xf32>
      %120 = math.tanh %119 : vector<8x32xf32>
      %121 = arith.mulf %116, %120 : vector<8x32xf32>
      %122 = arith.index_cast %arg11 : i32 to index
      %c0_66 = arith.constant 0 : index
      %c0_67 = arith.constant 0 : index
      %123 = vector.load %arg7[%122, %c0_66, %c0_67] : memref<8x8x32xf32, #tpu.memory_space<vmem>>, vector<1x8x32xf32>
      %124 = vector.shape_cast %123 : vector<1x8x32xf32> to vector<8x32xf32>
      %125 = vector.shape_cast %121 : vector<8x32xf32> to vector<1x8x32xf32>
      tpu.vector_store %arg7[%122, %c0_66, %c0_67], %125 {strides = array<i32>} : memref<8x8x32xf32, #tpu.memory_space<vmem>>, vector<1x8x32xf32>,
      scf.yield %79, %121, %77, %119 : vector<8x32xf32>, vector<8x32xf32>, vector<8x32xf32>, vector<8x32xf32>
    }
    %c8_i32_25 = arith.constant 8 : i32
    %c0_26 = arith.constant 0 : index
    %c0_27 = arith.constant 0 : index
    %c0_28 = arith.constant 0 : index
    %26 = vector.load %arg8[%c0_26, %c0_27, %c0_28] : memref<2x8x32xf32, #tpu.memory_space<vmem>>, vector<1x8x32xf32>
    %27 = vector.shape_cast %26 : vector<1x8x32xf32> to vector<8x32xf32>
    %28 = vector.shape_cast %25#0 : vector<8x32xf32> to vector<1x8x32xf32>
    tpu.vector_store %arg8[%c0_26, %c0_27, %c0_28], %28 {strides = array<i32>} : memref<2x8x32xf32, #tpu.memory_space<vmem>>, vector<1x8x32xf32>,
    %c0_29 = arith.constant 0 : index
    %c0_30 = arith.constant 0 : index
    %c0_31 = arith.constant 0 : index
    %29 = vector.load %arg9[%c0_29, %c0_30, %c0_31] : memref<2x8x32xf32, #tpu.memory_space<vmem>>, vector<1x8x32xf32>
    %30 = vector.shape_cast %29 : vector<1x8x32xf32> to vector<8x32xf32>
    %31 = vector.shape_cast %25#2 : vector<8x32xf32> to vector<1x8x32xf32>
    tpu.vector_store %arg9[%c0_29, %c0_30, %c0_31], %31 {strides = array<i32>} : memref<2x8x32xf32, #tpu.memory_space<vmem>>, vector<1x8x32xf32>,
    %c1_32 = arith.constant 1 : index
    %c0_33 = arith.constant 0 : index
    %c0_34 = arith.constant 0 : index
    %32 = vector.load %arg8[%c1_32, %c0_33, %c0_34] : memref<2x8x32xf32, #tpu.memory_space<vmem>>, vector<1x8x32xf32>
    %33 = vector.shape_cast %32 : vector<1x8x32xf32> to vector<8x32xf32>
    %34 = vector.shape_cast %25#1 : vector<8x32xf32> to vector<1x8x32xf32>
    tpu.vector_store %arg8[%c1_32, %c0_33, %c0_34], %34 {strides = array<i32>} : memref<2x8x32xf32, #tpu.memory_space<vmem>>, vector<1x8x32xf32>,
    %c1_35 = arith.constant 1 : index
    %c0_36 = arith.constant 0 : index
    %c0_37 = arith.constant 0 : index
    %35 = vector.load %arg9[%c1_35, %c0_36, %c0_37] : memref<2x8x32xf32, #tpu.memory_space<vmem>>, vector<1x8x32xf32>
    %36 = vector.shape_cast %35 : vector<1x8x32xf32> to vector<8x32xf32>
    %37 = vector.shape_cast %25#3 : vector<8x32xf32> to vector<1x8x32xf32>
    tpu.vector_store %arg9[%c1_35, %c0_36, %c0_37], %37 {strides = array<i32>} : memref<2x8x32xf32, #tpu.memory_space<vmem>>, vector<1x8x32xf32>,
    return
  }
  func.func @transform_0(%arg0: i32) -> (i32, i32, i32) {
    %c0_i32 = arith.constant 0 : i32
    %c0_i32_0 = arith.constant 0 : i32
    %c0_i32_1 = arith.constant 0 : i32
    return %arg0, %c0_i32, %c0_i32_0 : i32, i32, i32
  }
  func.func @transform_1(%arg0: i32) -> (i32, i32) {
    %c0_i32 = arith.constant 0 : i32
    %c0_i32_0 = arith.constant 0 : i32
    %c0_i32_1 = arith.constant 0 : i32
    return %c0_i32, %c0_i32_0 : i32, i32
  }
  func.func @transform_2(%arg0: i32) -> (i32, i32, i32) {
    %c0_i32 = arith.constant 0 : i32
    %c0_i32_0 = arith.constant 0 : i32
    %c0_i32_1 = arith.constant 0 : i32
    %c0_i32_2 = arith.constant 0 : i32
    return %c0_i32, %c0_i32_0, %c0_i32_1 : i32, i32, i32
  }
  func.func @transform_3(%arg0: i32) -> (i32, i32, i32) {
    %c0_i32 = arith.constant 0 : i32
    %c0_i32_0 = arith.constant 0 : i32
    %c0_i32_1 = arith.constant 0 : i32
    %c0_i32_2 = arith.constant 0 : i32
    return %c0_i32, %c0_i32_0, %c0_i32_1 : i32, i32, i32
  }
  func.func @transform_4(%arg0: i32) -> (i32, i32, i32) {
    %c0_i32 = arith.constant 0 : i32
    %c0_i32_0 = arith.constant 0 : i32
    %c0_i32_1 = arith.constant 0 : i32
    %c0_i32_2 = arith.constant 0 : i32
    return %c0_i32, %c0_i32_0, %c0_i32_1 : i32, i32, i32
  }
  func.func @transform_5(%arg0: i32) -> (i32, i32, i32) {
    %c0_i32 = arith.constant 0 : i32
    %c0_i32_0 = arith.constant 0 : i32
    %c0_i32_1 = arith.constant 0 : i32
    %c0_i32_2 = arith.constant 0 : i32
    return %c0_i32, %c0_i32_0, %c0_i32_1 : i32, i32, i32
  }
  func.func @transform_6(%arg0: i32) -> (i32, i32, i32) {
    %c0_i32 = arith.constant 0 : i32
    %c0_i32_0 = arith.constant 0 : i32
    %c0_i32_1 = arith.constant 0 : i32
    return %arg0, %c0_i32, %c0_i32_0 : i32, i32, i32
  }
  func.func @transform_7(%arg0: i32) -> (i32, i32, i32) {
    %c0_i32 = arith.constant 0 : i32
    %c0_i32_0 = arith.constant 0 : i32
    %c0_i32_1 = arith.constant 0 : i32
    %c0_i32_2 = arith.constant 0 : i32
    return %c0_i32, %c0_i32_0, %c0_i32_1 : i32, i32, i32
  }
  func.func @transform_8(%arg0: i32) -> (i32, i32, i32) {
    %c0_i32 = arith.constant 0 : i32
    %c0_i32_0 = arith.constant 0 : i32
    %c0_i32_1 = arith.constant 0 : i32
    %c0_i32_2 = arith.constant 0 : i32
    return %c0_i32, %c0_i32_0, %c0_i32_1 : i32, i32, i32
  }
}

</mosaic_0001>

<llo_original>
// kernel: tpu_custom_call.1
$region0: #{tpu_custom_call.1}
  #allocation0 [shape = 'u32[]', space=smem, size = 0x4, offset = 0x4, fixed_abs, tag = 'smem constant byte address 0x4 - core index']
  #allocation1 [shape = 'u32[144,128]{1,0:T(1,128)}', space=vmem, size = 0x12000, scoped, tag = 'internal scratch']
  #allocation2 [shape = 'f32[64,160]{1,0:T(8,128)}', space=vmem, size = 0x10000, scoped, tag = 'scratch operand']
  %s0 = inlined_call_operand.vmem [shape: bf16[1,64,128], index: 0, kind: input, shape index: {}]
  %s1 = inlined_call_operand.vmem [shape: bf16[128,160], index: 1, kind: input, shape index: {}]
  %s2 = inlined_call_operand.vmem [shape: bf16[2,32,160], index: 2, kind: input, shape index: {}]
  %s3 = inlined_call_operand.vmem [shape: bf16[2,32,32], index: 3, kind: input, shape index: {}]
  %s4 = inlined_call_operand.vmem [shape: bf16[2,32,128], index: 4, kind: input, shape index: {}]
  %s5 = inlined_call_operand.vmem [shape: f32[2,1,128], index: 5, kind: input, shape index: {}]
  %s6 = inlined_call_operand.hbm [shape: f32[8,8,32], index: 6, kind: output, shape index: {0}]
  %s7 = inlined_call_operand.hbm [shape: f32[2,8,32], index: 7, kind: output, shape index: {1}]
  %s8 = inlined_call_operand.hbm [shape: f32[2,8,32], index: 8, kind: output, shape index: {2}]
  %9 = xla_tuple %s6, %s7, %s8
  %s10 = sld [smem:[#allocation0]]
  $region61: #{tpu_custom_call.1} parent=0
    _
  %s12 = ssub.s32 1, %s10
  %s13 = scalar_select 0, %s12, %s10
  $region1: #{tpu_custom_call.1} parent=0
    #allocation3 [shape = 'u8[32768]{0}', space=vmem, size = 0x8000, scoped, tag = 'output window, operand 0, single buffered']
    #allocation4 [shape = 's32[1]{0}', space=sflag, size = 0x4, scoped, tag = 'scoped memory for tpu_custom_call.1']
    #allocation5 [shape = 'u8[8192]{0}', space=vmem, size = 0x2000, scoped, tag = 'output window, operand 1, single buffered']
    #allocation6 [shape = 's32[1]{0}', space=sflag, size = 0x4, scoped, tag = 'scoped memory for tpu_custom_call.1']
    #allocation7 [shape = 'u8[8192]{0}', space=vmem, size = 0x2000, scoped, tag = 'output window, operand 2, single buffered']
    %14 = vsyncpa [#allocation4], 0
    %15 = vsyncpa [#allocation6], 0
    // Predicated region
    $region2: #{tpu_custom_call.1} parent=1 // pred_check
      _
    $region3: #{tpu_custom_call.1} parent=1 // pred_check_branch
      %17 = sbr.rel (0) target = $region5
    $region4: #{tpu_custom_call.1} parent=1 // pred_region
      _
    $region5: #{tpu_custom_call.1} parent=1 // pred_fallthru
      _
    // Predicated region
    $region6: #{tpu_custom_call.1} parent=1 // pred_check
      _
    $region7: #{tpu_custom_call.1} parent=1 // pred_check_branch
      %19 = sbr.rel (0) target = $region9
    $region8: #{tpu_custom_call.1} parent=1 // pred_region
      _
    $region9: #{tpu_custom_call.1} parent=1 // pred_fallthru
      _
    // Predicated region
    $region10: #{tpu_custom_call.1} parent=1 // pred_check
      _
    $region11: #{tpu_custom_call.1} parent=1 // pred_check_branch
      %21 = sbr.rel (0) target = $region13
    $region12: #{tpu_custom_call.1} parent=1 // pred_region
      _
    $region13: #{tpu_custom_call.1} parent=1 // pred_fallthru
      _
    // Predicated region
    $region14: #{tpu_custom_call.1} parent=1 // pred_check
      _
    $region15: #{tpu_custom_call.1} parent=1 // pred_check_branch
      %23 = sbr.rel (0) target = $region17
    $region16: #{tpu_custom_call.1} parent=1 // pred_region
      _
    $region17: #{tpu_custom_call.1} parent=1 // pred_fallthru
      _
    // Predicated region
    $region18: #{tpu_custom_call.1} parent=1 // pred_check
      _
    $region19: #{tpu_custom_call.1} parent=1 // pred_check_branch
      %25 = sbr.rel (0) target = $region21
    $region20: #{tpu_custom_call.1} parent=1 // pred_region
      _
    $region21: #{tpu_custom_call.1} parent=1 // pred_fallthru
      _
    // Predicated region
    $region22: #{tpu_custom_call.1} parent=1 // pred_check
      _
    $region23: #{tpu_custom_call.1} parent=1 // pred_check_branch
      %27 = sbr.rel (0) target = $region25
    $region24: #{tpu_custom_call.1} parent=1 // pred_region
      _
    $region25: #{tpu_custom_call.1} parent=1 // pred_fallthru
      _
    %p29 = scmp.eq.s32.totalorder 0, 0
    // Predicated region
    $region26: #{tpu_custom_call.1} parent=1 // pred_check
      %p30 = pneg %p29
    $region27: #{tpu_custom_call.1} parent=1 // pred_check_branch
      %32 = sbr.rel (%p30) target = $region29
    $region28: #{tpu_custom_call.1} parent=1 // pred_region
      %vm33 = vcmask 261120
      %34 = vst.msk [vmem:[#allocation5] sm:$0xff] %vm33, 0.0
      %35 = vst.msk [vmem:[#allocation5 + $0x8] sm:$0xff] %vm33, 0.0
      %36 = vst.msk [vmem:[#allocation7] sm:$0xff] %vm33, 0.0
      %37 = vst.msk [vmem:[#allocation7 + $0x8] sm:$0xff] %vm33, 0.0
    $region29: #{tpu_custom_call.1} parent=1 // pred_fallthru
      _
    %v38 = vld [vmem:[%s0] sm:$0xf]
    %v39 = vld [vmem:[%s0 + $0x4] sm:$0xf]
    %v40 = vld [vmem:[%s0 + $0x8] sm:$0xf]
    %v41 = vld [vmem:[%s0 + $0xc] sm:$0xf]
    %v42 = vld [vmem:[%s0 + $0x10] sm:$0xf]
    %v43 = vld [vmem:[%s0 + $0x14] sm:$0xf]
    %v44 = vld [vmem:[%s0 + $0x18] sm:$0xf]
    %v45 = vld [vmem:[%s0 + $0x1c] sm:$0xf]
    %v46 = vld [vmem:[%s1] sm:$0xff]
    %v47 = vld [vmem:[%s1 + $0x8] sm:$0xff]
    %v48 = vld [vmem:[%s1 + $0x10] sm:$0xff]
    %v49 = vld [vmem:[%s1 + $0x18] sm:$0xff]
    %v50 = vld [vmem:[%s1 + $0x20] sm:$0xff]
    %v51 = vld [vmem:[%s1 + $0x28] sm:$0xff]
    %v52 = vld [vmem:[%s1 + $0x30] sm:$0xff]
    %v53 = vld [vmem:[%s1 + $0x38] sm:$0xff]
    %v54 = vld [vmem:[%s1 + $0x40] sm:$0xff]
    %v55 = vld [vmem:[%s1 + $0x48] sm:$0xff]
    %v56 = vld [vmem:[%s1 + $0x50] sm:$0xff]
    %v57 = vld [vmem:[%s1 + $0x58] sm:$0xff]
    %v58 = vld [vmem:[%s1 + $0x60] sm:$0xff]
    %v59 = vld [vmem:[%s1 + $0x68] sm:$0xff]
    %v60 = vld [vmem:[%s1 + $0x70] sm:$0xff]
    %v61 = vld [vmem:[%s1 + $0x78] sm:$0xff]
    %v70 = vunpack.c.l.b16 %v38
    %v71 = vunpack.c.l.b16 %v39
    %v72 = vunpack.c.l.b16 %v40
    %v73 = vunpack.c.l.b16 %v41
    %v74 = vunpack.c.l.b16 %v42
    %v75 = vunpack.c.l.b16 %v43
    %v76 = vunpack.c.l.b16 %v44
    %v77 = vunpack.c.l.b16 %v45
    %v78 = vpack.c.b16 %v71, %v70
    %v79 = vpack.c.b16 %v73, %v72
    %v80 = vpack.c.b16 %v75, %v74
    %v81 = vpack.c.b16 %v77, %v76
    %v102 = vunpack.c.l.b16 %v46
    %v103 = vunpack.c.h.b16 %v46
    %v104 = vunpack.c.l.b16 %v47
    %v105 = vunpack.c.h.b16 %v47
    %v106 = vunpack.c.l.b16 %v48
    %v107 = vunpack.c.h.b16 %v48
    %v108 = vunpack.c.l.b16 %v49
    %v109 = vunpack.c.h.b16 %v49
    %v110 = vunpack.c.l.b16 %v50
    %v111 = vunpack.c.h.b16 %v50
    %v112 = vunpack.c.l.b16 %v51
    %v113 = vunpack.c.h.b16 %v51
    %v114 = vunpack.c.l.b16 %v52
    %v115 = vunpack.c.h.b16 %v52
    %v116 = vunpack.c.l.b16 %v53
    %v117 = vunpack.c.h.b16 %v53
    %v118 = vunpack.c.l.b16 %v54
    %v119 = vunpack.c.h.b16 %v54
    %v120 = vunpack.c.l.b16 %v55
    %v121 = vunpack.c.h.b16 %v55
    %v122 = vunpack.c.l.b16 %v56
    %v123 = vunpack.c.h.b16 %v56
    %v124 = vunpack.c.l.b16 %v57
    %v125 = vunpack.c.h.b16 %v57
    %v126 = vunpack.c.l.b16 %v58
    %v127 = vunpack.c.h.b16 %v58
    %v128 = vunpack.c.l.b16 %v59
    %v129 = vunpack.c.h.b16 %v59
    %v130 = vunpack.c.l.b16 %v60
    %v131 = vunpack.c.h.b16 %v60
    %v132 = vunpack.c.l.b16 %v61
    %v133 = vunpack.c.h.b16 %v61
    %v134 = vpack.c.b16 %v104, %v102
    %v135 = vpack.c.b16 %v105, %v103
    %v136 = vpack.c.b16 %v108, %v106
    %v137 = vpack.c.b16 %v109, %v107
    %v138 = vpack.c.b16 %v112, %v110
    %v139 = vpack.c.b16 %v113, %v111
    %v140 = vpack.c.b16 %v116, %v114
    %v141 = vpack.c.b16 %v117, %v115
    %v142 = vpack.c.b16 %v120, %v118
    %v143 = vpack.c.b16 %v121, %v119
    %v144 = vpack.c.b16 %v124, %v122
    %v145 = vpack.c.b16 %v125, %v123
    %v146 = vpack.c.b16 %v128, %v126
    %v147 = vpack.c.b16 %v129, %v127
    %v148 = vpack.c.b16 %v132, %v130
    %v149 = vpack.c.b16 %v133, %v131
    %166 = vmatprep.subr.bf16.mxu0 %v135
    %167 = vmatpush1.bf16.msra.mxu0 %v134
    %168 = vmatprep.subr.bf16.mxu0 %v137
    %169 = vmatpush1.bf16.msra.mxu0 %v136
    %170 = vmatprep.subr.bf16.mxu0 %v139
    %171 = vmatpush1.bf16.msra.mxu0 %v138
    %172 = vmatprep.subr.bf16.mxu0 %v141
    %173 = vmatpush1.bf16.msra.mxu0 %v140
    %174 = vmatprep.subr.bf16.mxu0 %v143
    %175 = vmatpush1.bf16.msra.mxu0 %v142
    %176 = vmatprep.subr.bf16.mxu0 %v145
    %177 = vmatpush1.bf16.msra.mxu0 %v144
    %178 = vmatprep.subr.bf16.mxu0 %v147
    %179 = vmatpush1.bf16.msra.mxu0 %v146
    %180 = vmatprep.subr.bf16.mxu0 %v149
    %181 = vmatpush1.bf16.msra.mxu0 %v148
    %182 = vmatprep.subr.bf16.mxu0 0
    %183 = vmatpush1.bf16.msra.mxu0 0
    %184 = vmatprep.subr.bf16.mxu0 0
    %185 = vmatpush1.bf16.msra.mxu0 0
    %186 = vmatprep.subr.bf16.mxu0 0
    %187 = vmatpush1.bf16.msra.mxu0 0
    %188 = vmatprep.subr.bf16.mxu0 0
    %189 = vmatpush1.bf16.msra.mxu0 0
    %190 = vmatprep.subr.bf16.mxu0 0
    %191 = vmatpush1.bf16.msra.mxu0 0
    %192 = vmatprep.subr.bf16.mxu0 0
    %193 = vmatpush1.bf16.msra.mxu0 0
    %194 = vmatprep.subr.bf16.mxu0 0
    %195 = vmatpush1.bf16.msra.mxu0 0
    %196 = vmatprep.subr.bf16.mxu0 0
    %197 = vmatpush1.bf16.msra.mxu0 0
    %198 = vmatprep.mubr.bf16.mxu0 0
    %199 = vmatmul.mubr.bf16.gmra.mrb[0].mxu0 %v78
    %v200 = vpop.f32.mrb[0].mxu0
    %v201 = vadd.f32 0.0, %v200
    %v202 = vpop.f32.mrb[0].mxu0
    %v203 = vadd.f32 0.0, %v202
    %v204 = vpop.f32.mrb[0].mxu0
    %v205 = vadd.f32 0.0, %v204
    %v206 = vpop.f32.mrb[0].mxu0
    %v207 = vadd.f32 0.0, %v206
    %208 = vmatprep.mubr.bf16.mxu0 0
    %209 = vmatmul.mubr.bf16.gmra.mrb[0].mxu0 %v79
    %v210 = vpop.f32.mrb[0].mxu0
    %v211 = vadd.f32 0.0, %v210
    %v212 = vpop.f32.mrb[0].mxu0
    %v213 = vadd.f32 0.0, %v212
    %v214 = vpop.f32.mrb[0].mxu0
    %v215 = vadd.f32 0.0, %v214
    %v216 = vpop.f32.mrb[0].mxu0
    %v217 = vadd.f32 0.0, %v216
    %218 = vmatprep.mubr.bf16.mxu0 0
    %219 = vmatmul.mubr.bf16.gmra.mrb[0].mxu0 %v80
    %v220 = vpop.f32.mrb[0].mxu0
    %v221 = vadd.f32 0.0, %v220
    %v222 = vpop.f32.mrb[0].mxu0
    %v223 = vadd.f32 0.0, %v222
    %v224 = vpop.f32.mrb[0].mxu0
    %v225 = vadd.f32 0.0, %v224
    %v226 = vpop.f32.mrb[0].mxu0
    %v227 = vadd.f32 0.0, %v226
    %228 = vmatprep.mubr.bf16.mxu0 0
    %229 = vmatmul.mubr.bf16.gmra.mrb[0].mxu0 %v81
    %v230 = vpop.f32.mrb[0].mxu0
    %v231 = vadd.f32 0.0, %v230
    %v232 = vpop.f32.mrb[0].mxu0
    %v233 = vadd.f32 0.0, %v232
    %v234 = vpop.f32.mrb[0].mxu0
    %v235 = vadd.f32 0.0, %v234
    %v236 = vpop.f32.mrb[0].mxu0
    %v237 = vadd.f32 0.0, %v236
    %238 = vdwg.mxu0
    %239 = vst [vmem:[#allocation2] sm:$0xff] %v201
    %vm240 = vcmask 261120
    %241 = vst.msk [vmem:[#allocation2 + $0x8] sm:$0xff] %vm240, %v203
    %242 = vst [vmem:[#allocation2 + $0x10] sm:$0xff] %v205
    %243 = vst.msk [vmem:[#allocation2 + $0x18] sm:$0xff] %vm240, %v207
    %244 = vst [vmem:[#allocation2 + $0x20] sm:$0xff] %v211
    %245 = vst.msk [vmem:[#allocation2 + $0x28] sm:$0xff] %vm240, %v213
    %246 = vst [vmem:[#allocation2 + $0x30] sm:$0xff] %v215
    %247 = vst.msk [vmem:[#allocation2 + $0x38] sm:$0xff] %vm240, %v217
    %248 = vst [vmem:[#allocation2 + $0x40] sm:$0xff] %v221
    %249 = vst.msk [vmem:[#allocation2 + $0x48] sm:$0xff] %vm240, %v223
    %250 = vst [vmem:[#allocation2 + $0x50] sm:$0xff] %v225
    %251 = vst.msk [vmem:[#allocation2 + $0x58] sm:$0xff] %vm240, %v227
    %252 = vst [vmem:[#allocation2 + $0x60] sm:$0xff] %v231
    %253 = vst.msk [vmem:[#allocation2 + $0x68] sm:$0xff] %vm240, %v233
    %254 = vst [vmem:[#allocation2 + $0x70] sm:$0xff] %v235
    %255 = vst.msk [vmem:[#allocation2 + $0x78] sm:$0xff] %vm240, %v237
    %v256 = vld [vmem:[%s5] sm:$0x1]
    %v258 = vlaneseq
    %v259 = vshrl.u32 %v258, 7
    %v260 = vsub.s32 0, %v259
    %v261 = vrot.slane %v256, %v260
    %s263 = scalar_lea.vmem %s5, 1
    %v264 = vld [vmem:[%s263] sm:$0x1]
    %v266 = vlaneseq
    %v267 = vshrl.u32 %v266, 7
    %v268 = vsub.s32 0, %v267
    %v269 = vrot.slane %v264, %v268
    %v271 = vld [vmem:[#allocation5] sm:$0xff]
    %s272 = scalar_lea.vmem [#allocation5], 8
    %v273 = vld [vmem:[%s272] sm:$0xff]
    %v274 = vld [vmem:[#allocation7] sm:$0xff]
    %s275 = scalar_lea.vmem [#allocation7], 8
    %v276 = vld [vmem:[%s275] sm:$0xff]
    loop: start=0, step=1, limit=8
    $region30: #{tpu_custom_call.1} parent=1 // loop_pre_header
      _
    $region31: #{tpu_custom_call.1} parent=1 // loop_header
      %s278 = sphi 0, %s282
      %p279 = scmp.ge.s32.totalorder %s278, 8
      %v283 = vphi %v271, %v680
      %v284 = vphi %v273, %v674
      %v285 = vphi %v274, %v684
      %v286 = vphi %v276, %v688
    $region32: #{tpu_custom_call.1} parent=1 // loop_header_branch
      %281 = sbr.rel (%p279) target = $region36
    $region33: #{tpu_custom_call.1} parent=1 // loop_body
      %s287 = smul.u32 %s278, 8
      %s288 = sshra.s32 %s287, 3
      %s289 = sand.u32 %s287, 7
      %s290 = smul.u32 %s288, 2
      %s291 = smul.addr %s290, 8
      %s292 = scalar_lea.vmem [#allocation2], %s291
      %v293 = vld [vmem:[%s292] sm:$0xff]
      %v294 = vld [vmem:[%s292 + $0x8] sm:$0xff]
      %v295 = vpack.c.bf16 %v283, %v283
      %v296 = vld [vmem:[%s3] sm:$0xf]
      %v297 = vld [vmem:[%s3 + $0x4] sm:$0xf]
      %v298 = vld [vmem:[%s3 + $0x8] sm:$0xf]
      %v299 = vld [vmem:[%s3 + $0xc] sm:$0xf]
      %v304 = vunpack.c.l.b16 %v296
      %v305 = vunpack.c.l.b16 %v297
      %v306 = vunpack.c.l.b16 %v298
      %v307 = vunpack.c.l.b16 %v299
      %v308 = vpack.c.b16 %v305, %v304
      %v309 = vpack.c.b16 %v307, %v306
      %v313 = vsel %vm240, %v295, 0
      %315 = vmatprep.subr.bf16.mxu0 0
      %316 = vmatpush1.bf16.msra.mxu0 %v308
      %317 = vmatprep.subr.bf16.mxu0 0
      %318 = vmatpush1.bf16.msra.mxu0 %v309
      %319 = vmatprep.subr.bf16.mxu0 0
      %320 = vmatpush1.bf16.msra.mxu0 0
      %321 = vmatprep.subr.bf16.mxu0 0
      %322 = vmatpush1.bf16.msra.mxu0 0
      %323 = vmatprep.subr.bf16.mxu0 0
      %324 = vmatpush1.bf16.msra.mxu0 0
      %325 = vmatprep.subr.bf16.mxu0 0
      %326 = vmatpush1.bf16.msra.mxu0 0
      %327 = vmatprep.subr.bf16.mxu0 0
      %328 = vmatpush1.bf16.msra.mxu0 0
      %329 = vmatprep.subr.bf16.mxu0 0
      %330 = vmatpush1.bf16.msra.mxu0 0
      %331 = vmatprep.subr.bf16.mxu0 0
      %332 = vmatpush1.bf16.msra.mxu0 0
      %333 = vmatprep.subr.bf16.mxu0 0
      %334 = vmatpush1.bf16.msra.mxu0 0
      %335 = vmatprep.subr.bf16.mxu0 0
      %336 = vmatpush1.bf16.msra.mxu0 0
      %337 = vmatprep.subr.bf16.mxu0 0
      %338 = vmatpush1.bf16.msra.mxu0 0
      %339 = vmatprep.subr.bf16.mxu0 0
      %340 = vmatpush1.bf16.msra.mxu0 0
      %341 = vmatprep.subr.bf16.mxu0 0
      %342 = vmatpush1.bf16.msra.mxu0 0
      %343 = vmatprep.subr.bf16.mxu0 0
      %344 = vmatpush1.bf16.msra.mxu0 0
      %345 = vmatprep.subr.bf16.mxu0 0
      %346 = vmatpush1.bf16.msra.mxu0 0
      %347 = vmatprep.mubr.bf16.mxu0 0
      %348 = vmatmul.mubr.bf16.gmra.mrb[0].mxu0 %v313
      %v349 = vpop.f32.mrb[0].mxu0
      %v350 = vadd.f32 0.0, %v349
      %v351 = vpop.f32.mrb[0].mxu0
      %v352 = vpop.f32.mrb[0].mxu0
      %v353 = vpop.f32.mrb[0].mxu0
      %354 = vdwg.mxu0
      %v355 = vmul.f32 %v294, %v350
      %v356 = vpack.c.bf16 %v355, %v355
      %v357 = vld [vmem:[%s4] sm:$0xf]
      %v358 = vld [vmem:[%s4 + $0x4] sm:$0xf]
      %v359 = vld [vmem:[%s4 + $0x8] sm:$0xf]
      %v360 = vld [vmem:[%s4 + $0xc] sm:$0xf]
      %v365 = vunpack.c.l.b16 %v357
      %v366 = vunpack.c.l.b16 %v358
      %v367 = vunpack.c.l.b16 %v359
      %v368 = vunpack.c.l.b16 %v360
      %v369 = vpack.c.b16 %v366, %v365
      %v370 = vpack.c.b16 %v368, %v367
      %v374 = vsel %vm240, %v356, 0
      %376 = vmatprep.subr.bf16.mxu0 0
      %377 = vmatpush1.bf16.msra.mxu0 %v369
      %378 = vmatprep.subr.bf16.mxu0 0
      %379 = vmatpush1.bf16.msra.mxu0 %v370
      %380 = vmatprep.subr.bf16.mxu0 0
      %381 = vmatpush1.bf16.msra.mxu0 0
      %382 = vmatprep.subr.bf16.mxu0 0
      %383 = vmatpush1.bf16.msra.mxu0 0
      %384 = vmatprep.subr.bf16.mxu0 0
      %385 = vmatpush1.bf16.msra.mxu0 0
      %386 = vmatprep.subr.bf16.mxu0 0
      %387 = vmatpush1.bf16.msra.mxu0 0
      %388 = vmatprep.subr.bf16.mxu0 0
      %389 = vmatpush1.bf16.msra.mxu0 0
      %390 = vmatprep.subr.bf16.mxu0 0
      %391 = vmatpush1.bf16.msra.mxu0 0
      %392 = vmatprep.subr.bf16.mxu0 0
      %393 = vmatpush1.bf16.msra.mxu0 0
      %394 = vmatprep.subr.bf16.mxu0 0
      %395 = vmatpush1.bf16.msra.mxu0 0
      %396 = vmatprep.subr.bf16.mxu0 0
      %397 = vmatpush1.bf16.msra.mxu0 0
      %398 = vmatprep.subr.bf16.mxu0 0
      %399 = vmatpush1.bf16.msra.mxu0 0
      %400 = vmatprep.subr.bf16.mxu0 0
      %401 = vmatpush1.bf16.msra.mxu0 0
      %402 = vmatprep.subr.bf16.mxu0 0
      %403 = vmatpush1.bf16.msra.mxu0 0
      %404 = vmatprep.subr.bf16.mxu0 0
      %405 = vmatpush1.bf16.msra.mxu0 0
      %406 = vmatprep.subr.bf16.mxu0 0
      %407 = vmatpush1.bf16.msra.mxu0 0
      %408 = vmatprep.mubr.bf16.mxu0 0
      %409 = vmatmul.mubr.bf16.gmra.mrb[0].mxu0 %v374
      %v410 = vpop.f32.mrb[0].mxu0
      %v411 = vadd.f32 0.0, %v410
      %v412 = vpop.f32.mrb[0].mxu0
      %v413 = vpop.f32.mrb[0].mxu0
      %v414 = vpop.f32.mrb[0].mxu0
      %415 = vdwg.mxu0
      %v416 = vadd.f32 %v293, %v411
      %v417 = vadd.f32 %v416, %v261
      %v418 = vxor.u32 %v417, 2147483648
      %v419 = vmul.f32 %v418, 1.442695
      %v420 = vpow.pop %v419
      %v421 = vadd.f32 %v420, 1.0
      %v422 = vrcp.pop %v421
      %v423 = vmul.f32 1.0, %v422
      %v424 = vtanh.pop %v417
      %426 = vrot.lane.b32.xlu0 %v285, 32
      %v427 = vpop.permute.xlu0 %426
      %v429 = vmul.f32 %v423, %v427
      %431 = vrot.lane.b32.xlu0 %v424, 64
      %v432 = vpop.permute.xlu0 %431
      %v434 = vmul.f32 %v423, %v432
      %436 = vrot.lane.b32.xlu0 %v434, 32
      %v437 = vpop.permute.xlu0 %436
      %v439 = vadd.f32 %v429, %v437
      %v440 = vtanh.pop %v439
      %442 = vrot.lane.b32.xlu0 %v440, 64
      %v443 = vpop.permute.xlu0 %442
      %v445 = vmul.f32 %v423, %v443
      %v446 = vpack.c.bf16 %v445, %v445
      %s447 = scalar_lea.vmem %s2, 32
      %v448 = vld [vmem:[%s447] sm:$0xff]
      %v449 = vld [vmem:[%s447 + $0x8] sm:$0xff]
      %v450 = vld [vmem:[%s447 + $0x10] sm:$0xff]
      %v451 = vld [vmem:[%s447 + $0x18] sm:$0xff]
      %453 = vrot.lane.b32.xlu0 %v446, 32
      %v454 = vpop.permute.xlu0 %453
      %v459 = vunpack.c.l.b16 %v448
      %v460 = vunpack.c.h.b16 %v448
      %v461 = vunpack.c.l.b16 %v449
      %v462 = vunpack.c.h.b16 %v449
      %v463 = vunpack.c.l.b16 %v450
      %v464 = vunpack.c.h.b16 %v450
      %v465 = vunpack.c.l.b16 %v451
      %v466 = vunpack.c.h.b16 %v451
      %v467 = vpack.c.b16 %v461, %v459
      %v468 = vpack.c.b16 %v462, %v460
      %v469 = vpack.c.b16 %v465, %v463
      %v470 = vpack.c.b16 %v466, %v464
      %v476 = vsel %vm240, %v454, 0
      %478 = vmatprep.subr.bf16.mxu0 %v468
      %479 = vmatpush1.bf16.msra.mxu0 %v467
      %480 = vmatprep.subr.bf16.mxu0 %v470
      %481 = vmatpush1.bf16.msra.mxu0 %v469
      %482 = vmatprep.subr.bf16.mxu0 0
      %483 = vmatpush1.bf16.msra.mxu0 0
      %484 = vmatprep.subr.bf16.mxu0 0
      %485 = vmatpush1.bf16.msra.mxu0 0
      %486 = vmatprep.subr.bf16.mxu0 0
      %487 = vmatpush1.bf16.msra.mxu0 0
      %488 = vmatprep.subr.bf16.mxu0 0
      %489 = vmatpush1.bf16.msra.mxu0 0
      %490 = vmatprep.subr.bf16.mxu0 0
      %491 = vmatpush1.bf16.msra.mxu0 0
      %492 = vmatprep.subr.bf16.mxu0 0
      %493 = vmatpush1.bf16.msra.mxu0 0
      %494 = vmatprep.subr.bf16.mxu0 0
      %495 = vmatpush1.bf16.msra.mxu0 0
      %496 = vmatprep.subr.bf16.mxu0 0
      %497 = vmatpush1.bf16.msra.mxu0 0
      %498 = vmatprep.subr.bf16.mxu0 0
      %499 = vmatpush1.bf16.msra.mxu0 0
      %500 = vmatprep.subr.bf16.mxu0 0
      %501 = vmatpush1.bf16.msra.mxu0 0
      %502 = vmatprep.subr.bf16.mxu0 0
      %503 = vmatpush1.bf16.msra.mxu0 0
      %504 = vmatprep.subr.bf16.mxu0 0
      %505 = vmatpush1.bf16.msra.mxu0 0
      %506 = vmatprep.subr.bf16.mxu0 0
      %507 = vmatpush1.bf16.msra.mxu0 0
      %508 = vmatprep.subr.bf16.mxu0 0
      %509 = vmatpush1.bf16.msra.mxu0 0
      %510 = vmatprep.mubr.bf16.mxu0 0
      %511 = vmatmul.mubr.bf16.gmra.mrb[0].mxu0 %v476
      %v512 = vpop.f32.mrb[0].mxu0
      %v513 = vadd.f32 0.0, %v512
      %v514 = vpop.f32.mrb[0].mxu0
      %v515 = vadd.f32 0.0, %v514
      %v516 = vpop.f32.mrb[0].mxu0
      %v517 = vpop.f32.mrb[0].mxu0
      %518 = vdwg.mxu0
      %v519 = vpack.c.bf16 %v284, %v284
      %s520 = scalar_lea.vmem %s3, 16
      %v521 = vld [vmem:[%s520] sm:$0xf]
      %v522 = vld [vmem:[%s520 + $0x4] sm:$0xf]
      %v523 = vld [vmem:[%s520 + $0x8] sm:$0xf]
      %v524 = vld [vmem:[%s520 + $0xc] sm:$0xf]
      %v529 = vunpack.c.l.b16 %v521
      %v530 = vunpack.c.l.b16 %v522
      %v531 = vunpack.c.l.b16 %v523
      %v532 = vunpack.c.l.b16 %v524
      %v533 = vpack.c.b16 %v530, %v529
      %v534 = vpack.c.b16 %v532, %v531
      %v538 = vsel %vm240, %v519, 0
      %540 = vmatprep.subr.bf16.mxu0 0
      %541 = vmatpush1.bf16.msra.mxu0 %v533
      %542 = vmatprep.subr.bf16.mxu0 0
      %543 = vmatpush1.bf16.msra.mxu0 %v534
      %544 = vmatprep.subr.bf16.mxu0 0
      %545 = vmatpush1.bf16.msra.mxu0 0
      %546 = vmatprep.subr.bf16.mxu0 0
      %547 = vmatpush1.bf16.msra.mxu0 0
      %548 = vmatprep.subr.bf16.mxu0 0
      %549 = vmatpush1.bf16.msra.mxu0 0
      %550 = vmatprep.subr.bf16.mxu0 0
      %551 = vmatpush1.bf16.msra.mxu0 0
      %552 = vmatprep.subr.bf16.mxu0 0
      %553 = vmatpush1.bf16.msra.mxu0 0
      %554 = vmatprep.subr.bf16.mxu0 0
      %555 = vmatpush1.bf16.msra.mxu0 0
      %556 = vmatprep.subr.bf16.mxu0 0
      %557 = vmatpush1.bf16.msra.mxu0 0
      %558 = vmatprep.subr.bf16.mxu0 0
      %559 = vmatpush1.bf16.msra.mxu0 0
      %560 = vmatprep.subr.bf16.mxu0 0
      %561 = vmatpush1.bf16.msra.mxu0 0
      %562 = vmatprep.subr.bf16.mxu0 0
      %563 = vmatpush1.bf16.msra.mxu0 0
      %564 = vmatprep.subr.bf16.mxu0 0
      %565 = vmatpush1.bf16.msra.mxu0 0
      %566 = vmatprep.subr.bf16.mxu0 0
      %567 = vmatpush1.bf16.msra.mxu0 0
      %568 = vmatprep.subr.bf16.mxu0 0
      %569 = vmatpush1.bf16.msra.mxu0 0
      %570 = vmatprep.subr.bf16.mxu0 0
      %571 = vmatpush1.bf16.msra.mxu0 0
      %572 = vmatprep.mubr.bf16.mxu0 0
      %573 = vmatmul.mubr.bf16.gmra.mrb[0].mxu0 %v538
      %v574 = vpop.f32.mrb[0].mxu0
      %v575 = vadd.f32 0.0, %v574
      %v576 = vpop.f32.mrb[0].mxu0
      %v577 = vpop.f32.mrb[0].mxu0
      %v578 = vpop.f32.mrb[0].mxu0
      %579 = vdwg.mxu0
      %v580 = vmul.f32 %v515, %v575
      %v581 = vpack.c.bf16 %v580, %v580
      %s582 = scalar_lea.vmem %s4, 16
      %v583 = vld [vmem:[%s582] sm:$0xf]
      %v584 = vld [vmem:[%s582 + $0x4] sm:$0xf]
      %v585 = vld [vmem:[%s582 + $0x8] sm:$0xf]
      %v586 = vld [vmem:[%s582 + $0xc] sm:$0xf]
      %v591 = vunpack.c.l.b16 %v583
      %v592 = vunpack.c.l.b16 %v584
      %v593 = vunpack.c.l.b16 %v585
      %v594 = vunpack.c.l.b16 %v586
      %v595 = vpack.c.b16 %v592, %v591
      %v596 = vpack.c.b16 %v594, %v593
      %v600 = vsel %vm240, %v581, 0
      %602 = vmatprep.subr.bf16.mxu0 0
      %603 = vmatpush1.bf16.msra.mxu0 %v595
      %604 = vmatprep.subr.bf16.mxu0 0
      %605 = vmatpush1.bf16.msra.mxu0 %v596
      %606 = vmatprep.subr.bf16.mxu0 0
      %607 = vmatpush1.bf16.msra.mxu0 0
      %608 = vmatprep.subr.bf16.mxu0 0
      %609 = vmatpush1.bf16.msra.mxu0 0
      %610 = vmatprep.subr.bf16.mxu0 0
      %611 = vmatpush1.bf16.msra.mxu0 0
      %612 = vmatprep.subr.bf16.mxu0 0
      %613 = vmatpush1.bf16.msra.mxu0 0
      %614 = vmatprep.subr.bf16.mxu0 0
      %615 = vmatpush1.bf16.msra.mxu0 0
      %616 = vmatprep.subr.bf16.mxu0 0
      %617 = vmatpush1.bf16.msra.mxu0 0
      %618 = vmatprep.subr.bf16.mxu0 0
      %619 = vmatpush1.bf16.msra.mxu0 0
      %620 = vmatprep.subr.bf16.mxu0 0
      %621 = vmatpush1.bf16.msra.mxu0 0
      %622 = vmatprep.subr.bf16.mxu0 0
      %623 = vmatpush1.bf16.msra.mxu0 0
      %624 = vmatprep.subr.bf16.mxu0 0
      %625 = vmatpush1.bf16.msra.mxu0 0
      %626 = vmatprep.subr.bf16.mxu0 0
      %627 = vmatpush1.bf16.msra.mxu0 0
      %628 = vmatprep.subr.bf16.mxu0 0
      %629 = vmatpush1.bf16.msra.mxu0 0
      %630 = vmatprep.subr.bf16.mxu0 0
      %631 = vmatpush1.bf16.msra.mxu0 0
      %632 = vmatprep.subr.bf16.mxu0 0
      %633 = vmatpush1.bf16.msra.mxu0 0
      %634 = vmatprep.mubr.bf16.mxu0 0
      %635 = vmatmul.mubr.bf16.gmra.mrb[0].mxu0 %v600
      %v636 = vpop.f32.mrb[0].mxu0
      %v637 = vadd.f32 0.0, %v636
      %v638 = vpop.f32.mrb[0].mxu0
      %v639 = vpop.f32.mrb[0].mxu0
      %v640 = vpop.f32.mrb[0].mxu0
      %641 = vdwg.mxu0
      %v642 = vadd.f32 %v513, %v637
      %v643 = vadd.f32 %v642, %v269
      %v644 = vxor.u32 %v643, 2147483648
      %v645 = vmul.f32 %v644, 1.442695
      %v646 = vpow.pop %v645
      %v647 = vadd.f32 %v646, 1.0
      %v648 = vrcp.pop %v647
      %v649 = vmul.f32 1.0, %v648
      %v650 = vtanh.pop %v643
      %652 = vrot.lane.b32.xlu0 %v286, 32
      %v653 = vpop.permute.xlu0 %652
      %v655 = vmul.f32 %v649, %v653
      %657 = vrot.lane.b32.xlu0 %v650, 64
      %v658 = vpop.permute.xlu0 %657
      %v660 = vmul.f32 %v649, %v658
      %662 = vrot.lane.b32.xlu0 %v660, 32
      %v663 = vpop.permute.xlu0 %662
      %v665 = vadd.f32 %v655, %v663
      %v666 = vtanh.pop %v665
      %668 = vrot.lane.b32.xlu0 %v666, 64
      %v669 = vpop.permute.xlu0 %668
      %v671 = vmul.f32 %v649, %v669
      %673 = vrot.lane.b32.xlu0 %v671, 32
      %v674 = vpop.permute.xlu0 %673
      %s676 = scalar_lea.vmem [#allocation3], %s287
      %677 = vst.msk [vmem:[%s676] sm:$0xff] %vm240, %v674
      %679 = vrot.lane.b32.xlu0 %v445, 32
      %v680 = vpop.permute.xlu0 %679
      %683 = vrot.lane.b32.xlu0 %v439, 96
      %v684 = vpop.permute.xlu0 %683
      %687 = vrot.lane.b32.xlu0 %v665, 96
      %v688 = vpop.permute.xlu0 %687
    $region34: #{tpu_custom_call.1} parent=1 // loop_footer
      %s282 = sadd.s32 1, %s278
    $region35: #{tpu_custom_call.1} parent=1 // loop_footer_branch
      %277 = sbr.rel target = $region31
    $region36: #{tpu_custom_call.1} parent=1 // loop_exit
      _
    %690 = vst.msk [vmem:[#allocation5] sm:$0xff] %vm240, %v283
    %691 = vst.msk [vmem:[#allocation7] sm:$0xff] %vm240, %v285
    %692 = vst.msk [vmem:[%s272] sm:$0xff] %vm240, %v284
    %693 = vst.msk [vmem:[%s275] sm:$0xff] %vm240, %v286
    // Predicated region
    $region37: #{tpu_custom_call.1} parent=1 // pred_check
      _
    $region38: #{tpu_custom_call.1} parent=1 // pred_check_branch
      %695 = sbr.rel (0) target = $region40
    $region39: #{tpu_custom_call.1} parent=1 // pred_region
      %s697 = ssub.s32 1024, 1024
      %698 = vsyncadd [#allocation4], %s697
      %s699 = sshll.u32 [#allocation3], 4
      %s700 = int_to_ptr.vmem [resolvable:$true] %s699
      %705 = dma.vmem_to_hbm [thread:$0]  %s700, 1024, %s6, [#allocation4], 128, 128, 8
    $region40: #{tpu_custom_call.1} parent=1 // pred_fallthru
      _
    // Predicated region
    $region41: #{tpu_custom_call.1} parent=1 // pred_check
      _
    $region42: #{tpu_custom_call.1} parent=1 // pred_check_branch
      %707 = sbr.rel (0) target = $region44
    $region43: #{tpu_custom_call.1} parent=1 // pred_region
      %s709 = ssub.s32 256, 256
      %710 = vsyncadd [#allocation6], %s709
      %s711 = sshll.u32 [#allocation5], 4
      %s712 = int_to_ptr.vmem [resolvable:$true] %s711
      %717 = dma.vmem_to_hbm [thread:$0]  %s712, 256, %s7, [#allocation6], 128, 128, 8
    $region44: #{tpu_custom_call.1} parent=1 // pred_fallthru
      _
    // Predicated region
    $region45: #{tpu_custom_call.1} parent=1 // pred_check
      _
    $region46: #{tpu_custom_call.1} parent=1 // pred_check_branch
      %719 = sbr.rel (0) target = $region48
    $region47: #{tpu_custom_call.1} parent=1 // pred_region
      %s721 = ssub.s32 256, 256
      %722 = vsyncadd [#allocation6], %s721
      %s723 = sshll.u32 [#allocation7], 4
      %s724 = int_to_ptr.vmem [resolvable:$true] %s723
      %729 = dma.vmem_to_hbm [thread:$0]  %s724, 256, %s8, [#allocation6], 128, 128, 8
    $region48: #{tpu_custom_call.1} parent=1 // pred_fallthru
      _
    // Predicated region
    $region49: #{tpu_custom_call.1} parent=1 // pred_check
      _
    $region50: #{tpu_custom_call.1} parent=1 // pred_check_branch
      %731 = sbr.rel (0) target = $region52
    $region51: #{tpu_custom_call.1} parent=1 // pred_region
      %732 = dma.done [#allocation4], 1024
    $region52: #{tpu_custom_call.1} parent=1 // pred_fallthru
      _
    // Predicated region
    $region53: #{tpu_custom_call.1} parent=1 // pred_check
      _
    $region54: #{tpu_custom_call.1} parent=1 // pred_check_branch
      %734 = sbr.rel (0) target = $region56
    $region55: #{tpu_custom_call.1} parent=1 // pred_region
      %735 = dma.done [#allocation6], 256
    $region56: #{tpu_custom_call.1} parent=1 // pred_fallthru
      _
    // Predicated region
    $region57: #{tpu_custom_call.1} parent=1 // pred_check
      _
    $region58: #{tpu_custom_call.1} parent=1 // pred_check_branch
      %737 = sbr.rel (0) target = $region60
    $region59: #{tpu_custom_call.1} parent=1 // pred_region
      %738 = dma.done [#allocation6], 256
    $region60: #{tpu_custom_call.1} parent=1 // pred_fallthru
      _
    %739 = vsyncpa [#allocation4], 1
    %740 = vsyncpa [#allocation6], 1

</llo_original>
